<compile_context>
chip_gen: v7x
topology: tpu7x:2x2x1
jax: 0.10.0
libtpu: 0.0.40
codegen_flags: <defaults>
</compile_context>

<pallas_src>
import functools

import jax
import jax.numpy as jnp
import numpy as np
from jax.experimental import pallas as pl
from jax.experimental.pallas import tpu as pltpu


def rectified_flow_kernel(BC, tb_ref, x_ref, z0_ref, wbd_ref, psum_ref, zt_scr):
    """Single grid-free invocation over the whole (B*C, H*W) tile.

    tb_ref   : (BC, 2)   col 0 = per-row t, col 1 = fused per-row bias
    x_ref    : (BC, HW)  z1 rows
    z0_ref   : (BC, HW)  noise rows
    wbd_ref  : (BC, BC)  block-diagonal kron(I_B, w1) channel-mix weight
    psum_ref : (BC, 128) output: per-lane partial sums of (model_out - ut)^2
    zt_scr   : (BC, HW)  VMEM scratch holding zt
    """
    x = x_ref[...]                       # (BC, HW)  == z1
    z0 = z0_ref[...]                     # (BC, HW)
    t = tb_ref[:, 0:1]                   # (BC, 1)
    bias = tb_ref[:, 1:2]                # (BC, 1) = b1 + wt*t + cond @ wc.T

    # rectified-flow target velocity + strength-reduced interpolation
    ut = x - z0
    zt_scr[...] = z0 + t * ut            # stage zt in VMEM for row re-loads

    # Per-batch 1x1-conv channel mix as broadcast FMAs.  Each zt row comes
    # from a VMEM ref load (vld slot) instead of sublane-extracting the live
    # vreg value; two independent accumulators shorten the VALU dep chain.
    # TODO(synk): at larger C (BC ~64+) switch this to a single
    # jnp.dot(wbd_ref[...], zt) on the otherwise-idle MXU.
    h0 = wbd_ref[:, 0:1] * zt_scr[0:1, :]
    h1 = wbd_ref[:, 1:2] * zt_scr[1:2, :]
    for p in range(1, BC // 2):
        k = 2 * p
        h0 = h0 + wbd_ref[:, k:k + 1] * zt_scr[k:k + 1, :]
        h1 = h1 + wbd_ref[:, k + 1:k + 2] * zt_scr[k + 1:k + 2, :]
    h = h0 + h1
    if BC % 2:
        h = h + wbd_ref[:, BC - 1:BC] * zt_scr[BC - 1:BC, :]

    diff = (h + bias) - ut
    dsq = diff * diff

    # Lane-dense partial reduction: (BC, HW) -> (BC, 128).  Slices are at
    # 128-lane vreg boundaries; the final cross-lane reduce happens in the
    # wrapper so the store here is a full, unmasked vreg store.
    HW = dsq.shape[1]
    acc = dsq[:, 0:128]
    for j in range(1, HW // 128):
        acc = acc + dsq[:, j * 128:(j + 1) * 128]
    psum_ref[...] = acc


def prepare_static_params(params, B, C):
    """Parameter-only prep; compute once, outside the per-step path."""
    w1, b1, wt, wc = params
    BC = B * C
    wbd = jnp.kron(jnp.eye(B, dtype=w1.dtype), w1)                  # (BC, BC)
    b1_rows = jnp.tile(b1.reshape(1, C), (B, 1)).reshape(BC, 1)     # (BC, 1)
    wt_rows = jnp.tile(wt.reshape(1, C), (B, 1)).reshape(BC, 1)     # (BC, 1)
    return wbd, b1_rows, wt_rows, wc


@jax.jit
def rectified_flow_forward(x, cond, z0, t, prep):
    """x: (B,C,H,W) f32, cond: (B,E) f32, z0: like x, t: (B,) f32."""
    wbd, b1_rows, wt_rows, wc = prep
    B, C, H, W = x.shape
    HW = H * W
    BC = B * C
    assert HW % 128 == 0, "lane-dense reduction assumes HW % 128 == 0"

    # Fold batch into the sublane dimension: (B, C, H, W) -> (B*C, HW).
    x2 = x.reshape(BC, HW)
    z02 = z0.reshape(BC, HW)
    t_rows = jnp.repeat(t, C).reshape(BC, 1)

    # Fused per-row bias (b1 + wt*t + condition embedding), packed with t
    # into a single (BC, 2) input -> one tiny DMA instead of four.
    bias_rows = b1_rows + wt_rows * t_rows + (cond @ wc.T).reshape(BC, 1)
    tb = jnp.concatenate([t_rows, bias_rows], axis=1)               # (BC, 2)

    kernel = functools.partial(rectified_flow_kernel, BC)
    vmem = pl.BlockSpec(memory_space=pltpu.MemorySpace.VMEM)

    psum = pl.pallas_call(
        kernel,
        out_shape=jax.ShapeDtypeStruct((BC, 128), jnp.float32),
        in_specs=[vmem] * 4,
        out_specs=vmem,
        scratch_shapes=[pltpu.VMEM((BC, HW), jnp.float32)],
    )(tb, x2, z02, wbd)

    # Trailing tiny reductions (fused by XLA under jit): finish the 128-lane
    # reduce, per-sample MSE over non-batch dims, batch-mean loss.
    sqsum = jnp.sum(psum, axis=1)                                   # (BC,)
    mse = sqsum.reshape(B, C).sum(axis=1) * (1.0 / (C * HW))        # (B,)
    loss = jnp.mean(mse)

    # TODO(synk): the 'Capacity_Pred' tuple-output / chunk(2, dim=1) branches
    # are not exercised: the synthetic model returns a plain tensor whose
    # channel count matches x.
    return {"loss": loss, "cp_loss": jnp.float32(0.0), "mse": mse}


def reference_forward(x, cond, z0, t, params):
    """Pure-JAX reference mirroring the PyTorch semantics (given same z0/t)."""
    w1, b1, wt, wc = params
    B, C, H, W = x.shape
    texp = t.reshape(B, 1, 1, 1)
    zt = texp * x + (1.0 - texp) * z0
    ut = x - z0
    zt3 = zt.reshape(B, C, H * W)
    h = jnp.einsum('ij,bjk->bik', w1, zt3)
    temb = wt[None, :, :] * t.reshape(B, 1, 1)
    cemb = jnp.einsum('ce,be->bc', wc, cond)[:, :, None]
    mo = h + b1[None, :, :] + temb + cemb
    diff = mo - ut.reshape(B, C, H * W)
    mse = jnp.mean(diff * diff, axis=(1, 2))
    return mse, jnp.mean(mse)


if __name__ == "__main__":
    B, C, H, W, E = 2, 4, 16, 16, 8

    key = jax.random.PRNGKey(0)
    k_x, k_cond, k_z0, k_t, k_w1, k_b1, k_wt, k_wc = jax.random.split(key, 8)

    x = jax.random.normal(k_x, (B, C, H, W), dtype=jnp.float32)
    cond = jax.random.normal(k_cond, (B, E), dtype=jnp.float32)
    # RNG that torch.randn_like / torch.rand would produce, generated here
    # deterministically in JAX and fed to the kernel.
    z0 = jax.random.normal(k_z0, (B, C, H, W), dtype=jnp.float32)
    t = jax.random.uniform(k_t, (B,), dtype=jnp.float32)

    # Deterministic synthetic model parameters.
    w1 = 0.1 * jax.random.normal(k_w1, (C, C), dtype=jnp.float32)
    b1 = 0.1 * jax.random.normal(k_b1, (C, 1), dtype=jnp.float32)
    wt = 0.1 * jax.random.normal(k_wt, (C, 1), dtype=jnp.float32)
    wc = 0.1 * jax.random.normal(k_wc, (C, E), dtype=jnp.float32)
    params = (w1, b1, wt, wc)

    # Parameter-only prep hoisted out of the (jitted) per-step path.
    prep = jax.tree.map(jax.block_until_ready, prepare_static_params(params, B, C))

    terms = rectified_flow_forward(x, cond, z0, t, prep)
    jax.block_until_ready(terms)

    ref_mse, ref_loss = reference_forward(x, cond, z0, t, params)
    assert np.allclose(np.asarray(terms["mse"]), np.asarray(ref_mse),
                       rtol=1e-4, atol=1e-5), (terms["mse"], ref_mse)
    assert np.allclose(np.asarray(terms["loss"]), np.asarray(ref_loss),
                       rtol=1e-4, atol=1e-5), (terms["loss"], ref_loss)

    print("KERNEL_OK")
</pallas_src>

<mosaic_0001>
module attributes {stable_mosaic.version = 11 : i64} {
  func.func @rectified_flow_kernel(%arg0: memref<8x2xf32, #tpu.memory_space<vmem>>, %arg1: memref<8x256xf32, #tpu.memory_space<vmem>>, %arg2: memref<8x256xf32, #tpu.memory_space<vmem>>, %arg3: memref<8x8xf32, #tpu.memory_space<vmem>>, %arg4: memref<8x128xf32, #tpu.memory_space<vmem>>, %arg5: memref<8x256xf32, #tpu.memory_space<vmem>>) attributes {dimension_semantics = [], scalar_prefetch = 0 : i64, scratch_operands = 1 : i64, tpu.core_type = #tpu.core_type<tc>} {
    %c0 = arith.constant 0 : index
    %c0_0 = arith.constant 0 : index
    %0 = vector.load %arg1[%c0, %c0_0] : memref<8x256xf32, #tpu.memory_space<vmem>>, vector<8x256xf32>
    %c0_1 = arith.constant 0 : index
    %c0_2 = arith.constant 0 : index
    %1 = vector.load %arg2[%c0_1, %c0_2] : memref<8x256xf32, #tpu.memory_space<vmem>>, vector<8x256xf32>
    %c0_3 = arith.constant 0 : index
    %c0_4 = arith.constant 0 : index
    %2 = vector.load %arg0[%c0_3, %c0_4] : memref<8x2xf32, #tpu.memory_space<vmem>>, vector<8x1xf32>
    %c0_5 = arith.constant 0 : index
    %c1 = arith.constant 1 : index
    %3 = vector.load %arg0[%c0_5, %c1] : memref<8x2xf32, #tpu.memory_space<vmem>>, vector<8x1xf32>
    %4 = arith.subf %0, %1 : vector<8x256xf32>
    %5 = vector.broadcast %2 : vector<8x1xf32> to vector<8x256xf32>
    %6 = arith.mulf %5, %4 : vector<8x256xf32>
    %7 = arith.addf %1, %6 : vector<8x256xf32>
    %c0_6 = arith.constant 0 : index
    %c0_7 = arith.constant 0 : index
    %8 = vector.load %arg5[%c0_6, %c0_7] : memref<8x256xf32, #tpu.memory_space<vmem>>, vector<8x256xf32>
    tpu.vector_store %arg5[%c0_6, %c0_7], %7 {strides = array<i32>} : memref<8x256xf32, #tpu.memory_space<vmem>>, vector<8x256xf32>,
    %c0_8 = arith.constant 0 : index
    %c0_9 = arith.constant 0 : index
    %9 = vector.load %arg3[%c0_8, %c0_9] : memref<8x8xf32, #tpu.memory_space<vmem>>, vector<8x1xf32>
    %c0_10 = arith.constant 0 : index
    %c0_11 = arith.constant 0 : index
    %10 = vector.load %arg5[%c0_10, %c0_11] : memref<8x256xf32, #tpu.memory_space<vmem>>, vector<1x256xf32>
    %11 = vector.broadcast %9 : vector<8x1xf32> to vector<8x256xf32>
    %12 = vector.broadcast %10 : vector<1x256xf32> to vector<8x256xf32>
    %13 = arith.mulf %11, %12 : vector<8x256xf32>
    %c0_12 = arith.constant 0 : index
    %c1_13 = arith.constant 1 : index
    %14 = vector.load %arg3[%c0_12, %c1_13] : memref<8x8xf32, #tpu.memory_space<vmem>>, vector<8x1xf32>
    %c1_14 = arith.constant 1 : index
    %c0_15 = arith.constant 0 : index
    %15 = vector.load %arg5[%c1_14, %c0_15] : memref<8x256xf32, #tpu.memory_space<vmem>>, vector<1x256xf32>
    %16 = vector.broadcast %14 : vector<8x1xf32> to vector<8x256xf32>
    %17 = vector.broadcast %15 : vector<1x256xf32> to vector<8x256xf32>
    %18 = arith.mulf %16, %17 : vector<8x256xf32>
    %c0_16 = arith.constant 0 : index
    %c2 = arith.constant 2 : index
    %19 = vector.load %arg3[%c0_16, %c2] : memref<8x8xf32, #tpu.memory_space<vmem>>, vector<8x1xf32>
    %c2_17 = arith.constant 2 : index
    %c0_18 = arith.constant 0 : index
    %20 = vector.load %arg5[%c2_17, %c0_18] : memref<8x256xf32, #tpu.memory_space<vmem>>, vector<1x256xf32>
    %21 = vector.broadcast %19 : vector<8x1xf32> to vector<8x256xf32>
    %22 = vector.broadcast %20 : vector<1x256xf32> to vector<8x256xf32>
    %23 = arith.mulf %21, %22 : vector<8x256xf32>
    %24 = arith.addf %13, %23 : vector<8x256xf32>
    %c0_19 = arith.constant 0 : index
    %c3 = arith.constant 3 : index
    %25 = vector.load %arg3[%c0_19, %c3] : memref<8x8xf32, #tpu.memory_space<vmem>>, vector<8x1xf32>
    %c3_20 = arith.constant 3 : index
    %c0_21 = arith.constant 0 : index
    %26 = vector.load %arg5[%c3_20, %c0_21] : memref<8x256xf32, #tpu.memory_space<vmem>>, vector<1x256xf32>
    %27 = vector.broadcast %25 : vector<8x1xf32> to vector<8x256xf32>
    %28 = vector.broadcast %26 : vector<1x256xf32> to vector<8x256xf32>
    %29 = arith.mulf %27, %28 : vector<8x256xf32>
    %30 = arith.addf %18, %29 : vector<8x256xf32>
    %c0_22 = arith.constant 0 : index
    %c4 = arith.constant 4 : index
    %31 = vector.load %arg3[%c0_22, %c4] : memref<8x8xf32, #tpu.memory_space<vmem>>, vector<8x1xf32>
    %c4_23 = arith.constant 4 : index
    %c0_24 = arith.constant 0 : index
    %32 = vector.load %arg5[%c4_23, %c0_24] : memref<8x256xf32, #tpu.memory_space<vmem>>, vector<1x256xf32>
    %33 = vector.broadcast %31 : vector<8x1xf32> to vector<8x256xf32>
    %34 = vector.broadcast %32 : vector<1x256xf32> to vector<8x256xf32>
    %35 = arith.mulf %33, %34 : vector<8x256xf32>
    %36 = arith.addf %24, %35 : vector<8x256xf32>
    %c0_25 = arith.constant 0 : index
    %c5 = arith.constant 5 : index
    %37 = vector.load %arg3[%c0_25, %c5] : memref<8x8xf32, #tpu.memory_space<vmem>>, vector<8x1xf32>
    %c5_26 = arith.constant 5 : index
    %c0_27 = arith.constant 0 : index
    %38 = vector.load %arg5[%c5_26, %c0_27] : memref<8x256xf32, #tpu.memory_space<vmem>>, vector<1x256xf32>
    %39 = vector.broadcast %37 : vector<8x1xf32> to vector<8x256xf32>
    %40 = vector.broadcast %38 : vector<1x256xf32> to vector<8x256xf32>
    %41 = arith.mulf %39, %40 : vector<8x256xf32>
    %42 = arith.addf %30, %41 : vector<8x256xf32>
    %c0_28 = arith.constant 0 : index
    %c6 = arith.constant 6 : index
    %43 = vector.load %arg3[%c0_28, %c6] : memref<8x8xf32, #tpu.memory_space<vmem>>, vector<8x1xf32>
    %c6_29 = arith.constant 6 : index
    %c0_30 = arith.constant 0 : index
    %44 = vector.load %arg5[%c6_29, %c0_30] : memref<8x256xf32, #tpu.memory_space<vmem>>, vector<1x256xf32>
    %45 = vector.broadcast %43 : vector<8x1xf32> to vector<8x256xf32>
    %46 = vector.broadcast %44 : vector<1x256xf32> to vector<8x256xf32>
    %47 = arith.mulf %45, %46 : vector<8x256xf32>
    %48 = arith.addf %36, %47 : vector<8x256xf32>
    %c0_31 = arith.constant 0 : index
    %c7 = arith.constant 7 : index
    %49 = vector.load %arg3[%c0_31, %c7] : memref<8x8xf32, #tpu.memory_space<vmem>>, vector<8x1xf32>
    %c7_32 = arith.constant 7 : index
    %c0_33 = arith.constant 0 : index
    %50 = vector.load %arg5[%c7_32, %c0_33] : memref<8x256xf32, #tpu.memory_space<vmem>>, vector<1x256xf32>
    %51 = vector.broadcast %49 : vector<8x1xf32> to vector<8x256xf32>
    %52 = vector.broadcast %50 : vector<1x256xf32> to vector<8x256xf32>
    %53 = arith.mulf %51, %52 : vector<8x256xf32>
    %54 = arith.addf %42, %53 : vector<8x256xf32>
    %55 = arith.addf %48, %54 : vector<8x256xf32>
    %56 = vector.broadcast %3 : vector<8x1xf32> to vector<8x256xf32>
    %57 = arith.addf %55, %56 : vector<8x256xf32>
    %58 = arith.subf %57, %4 : vector<8x256xf32>
    %59 = arith.mulf %58, %58 : vector<8x256xf32>
    %60 = vector.extract_strided_slice %59 {offsets = [0, 0], sizes = [8, 128], strides = [1, 1]} : vector<8x256xf32> to vector<8x128xf32>
    %61 = vector.extract_strided_slice %59 {offsets = [0, 128], sizes = [8, 128], strides = [1, 1]} : vector<8x256xf32> to vector<8x128xf32>
    %62 = arith.addf %60, %61 : vector<8x128xf32>
    %c0_34 = arith.constant 0 : index
    %c0_35 = arith.constant 0 : index
    %63 = vector.load %arg4[%c0_34, %c0_35] : memref<8x128xf32, #tpu.memory_space<vmem>>, vector<8x128xf32>
    tpu.vector_store %arg4[%c0_34, %c0_35], %62 {strides = array<i32>} : memref<8x128xf32, #tpu.memory_space<vmem>>, vector<8x128xf32>,
    return
  }
}

</mosaic_0001>

<llo_original>
// kernel: rectified_flow_forward.1
$region0: #{rectified_flow_forward.1}
  #allocation0 [shape = 'u32[]', space=smem, size = 0x4, offset = 0x4, fixed_abs, tag = 'smem constant byte address 0x4 - core index']
  #allocation1 [shape = 'u32[144,128]{1,0:T(1,128)}', space=vmem, size = 0x12000, scoped, tag = 'internal scratch']
  #allocation2 [shape = 'f32[8,256]{1,0:T(8,128)}', space=vmem, size = 0x2000, scoped, tag = 'scratch operand']
  %s0 = inlined_call_operand.vmem [shape: f32[8,2], index: 0, kind: input, shape index: {}]
  %s1 = inlined_call_operand.vmem [shape: f32[8,256], index: 1, kind: input, shape index: {}]
  %s2 = inlined_call_operand.vmem [shape: f32[8,256], index: 2, kind: input, shape index: {}]
  %s3 = inlined_call_operand.vmem [shape: f32[8,8], index: 3, kind: input, shape index: {}]
  %s4 = inlined_call_operand.vmem [shape: f32[8,128], index: 4, kind: output, shape index: {}]
  %s5 = sld [smem:[#allocation0]]
  $region26: #{rectified_flow_forward.1} parent=0
    _
  %s7 = ssub.s32 1, %s5
  %s8 = scalar_select 0, %s7, %s5
  // Predicated region
  $region2: #{rectified_flow_forward.1} parent=0 // pred_check
    _
  $region3: #{rectified_flow_forward.1} parent=0 // pred_check_branch
    %10 = sbr.rel (0) target = $region5
  $region4: #{rectified_flow_forward.1} parent=0 // pred_region
    _
  $region5: #{rectified_flow_forward.1} parent=0 // pred_fallthru
    _
  // Predicated region
  $region6: #{rectified_flow_forward.1} parent=0 // pred_check
    _
  $region7: #{rectified_flow_forward.1} parent=0 // pred_check_branch
    %12 = sbr.rel (0) target = $region9
  $region8: #{rectified_flow_forward.1} parent=0 // pred_region
    _
  $region9: #{rectified_flow_forward.1} parent=0 // pred_fallthru
    _
  // Predicated region
  $region10: #{rectified_flow_forward.1} parent=0 // pred_check
    _
  $region11: #{rectified_flow_forward.1} parent=0 // pred_check_branch
    %14 = sbr.rel (0) target = $region13
  $region12: #{rectified_flow_forward.1} parent=0 // pred_region
    _
  $region13: #{rectified_flow_forward.1} parent=0 // pred_fallthru
    _
  // Predicated region
  $region14: #{rectified_flow_forward.1} parent=0 // pred_check
    _
  $region15: #{rectified_flow_forward.1} parent=0 // pred_check_branch
    %16 = sbr.rel (0) target = $region17
  $region16: #{rectified_flow_forward.1} parent=0 // pred_region
    _
  $region17: #{rectified_flow_forward.1} parent=0 // pred_fallthru
    _
  %v17 = vld [vmem:[%s1] sm:$0xff]
  %v18 = vld [vmem:[%s1 + $0x8] sm:$0xff]
  %v19 = vld [vmem:[%s2] sm:$0xff]
  %v20 = vld [vmem:[%s2 + $0x8] sm:$0xff]
  %v21 = vld [vmem:[%s0] sm:$0xff]
  %v22 = vsub.f32 %v17, %v19
  %v23 = vsub.f32 %v18, %v20
  %25 = vset.pattern.permute.xlu0 0
  %26 = vperm.xlu0 %25, %v21
  %v27 = vpop.permute.xlu0 %26
  %v29 = vmul.f32 %v27, %v22
  %v30 = vmul.f32 %v27, %v23
  %v31 = vadd.f32 %v19, %v29
  %v32 = vadd.f32 %v20, %v30
  %33 = vst [vmem:[#allocation2] sm:$0xff] %v31
  %34 = vst [vmem:[#allocation2 + $0x8] sm:$0xff] %v32
  %v35 = vld [vmem:[%s3] sm:$0xff]
  %v36 = vld [vmem:[#allocation2] ss:$8 sm:$0x3]
  %38 = vset.pattern.permute.xlu0 0
  %39 = vperm.xlu0 %38, %v35
  %v40 = vpop.permute.xlu0 %39
  %v43 = vlaneseq
  %v44 = vshrl.u32 %v43, 7
  %v45 = vsub.s32 0, %v44
  %v46 = vrot.slane %v36, %v45
  %v47 = vlaneseq
  %v48 = vshrl.u32 %v47, 7
  %v49 = vsub.s32 1, %v48
  %v50 = vrot.slane %v36, %v49
  %v53 = vmul.f32 %v40, %v46
  %v54 = vmul.f32 %v40, %v50
  %s55 = scalar_lea.vmem [#allocation2], 1
  %v56 = vld [vmem:[%s55] ss:$8 sm:$0x3]
  %57 = vset.pattern.permute.xlu0 1
  %58 = vperm.xlu0 %57, %v35
  %v59 = vpop.permute.xlu0 %58
  %v62 = vlaneseq
  %v63 = vshrl.u32 %v62, 7
  %v64 = vsub.s32 0, %v63
  %v65 = vrot.slane %v56, %v64
  %v66 = vlaneseq
  %v67 = vshrl.u32 %v66, 7
  %v68 = vsub.s32 1, %v67
  %v69 = vrot.slane %v56, %v68
  %v72 = vmul.f32 %v59, %v65
  %v73 = vmul.f32 %v59, %v69
  %s74 = scalar_lea.vmem [#allocation2], 2
  %v75 = vld [vmem:[%s74] ss:$8 sm:$0x3]
  %76 = vset.pattern.permute.xlu0 2
  %77 = vperm.xlu0 %76, %v35
  %v78 = vpop.permute.xlu0 %77
  %v81 = vlaneseq
  %v82 = vshrl.u32 %v81, 7
  %v83 = vsub.s32 0, %v82
  %v84 = vrot.slane %v75, %v83
  %v85 = vlaneseq
  %v86 = vshrl.u32 %v85, 7
  %v87 = vsub.s32 1, %v86
  %v88 = vrot.slane %v75, %v87
  %v91 = vmul.f32 %v78, %v84
  %v92 = vmul.f32 %v78, %v88
  %v93 = vadd.f32 %v53, %v91
  %v94 = vadd.f32 %v54, %v92
  %s95 = scalar_lea.vmem [#allocation2], 3
  %v96 = vld [vmem:[%s95] ss:$8 sm:$0x3]
  %97 = vset.pattern.permute.xlu0 3
  %98 = vperm.xlu0 %97, %v35
  %v99 = vpop.permute.xlu0 %98
  %v102 = vlaneseq
  %v103 = vshrl.u32 %v102, 7
  %v104 = vsub.s32 0, %v103
  %v105 = vrot.slane %v96, %v104
  %v106 = vlaneseq
  %v107 = vshrl.u32 %v106, 7
  %v108 = vsub.s32 1, %v107
  %v109 = vrot.slane %v96, %v108
  %v112 = vmul.f32 %v99, %v105
  %v113 = vmul.f32 %v99, %v109
  %v114 = vadd.f32 %v72, %v112
  %v115 = vadd.f32 %v73, %v113
  %s116 = scalar_lea.vmem [#allocation2], 4
  %v117 = vld [vmem:[%s116] ss:$8 sm:$0x3]
  %118 = vset.pattern.permute.xlu0 4
  %119 = vperm.xlu0 %118, %v35
  %v120 = vpop.permute.xlu0 %119
  %v123 = vlaneseq
  %v124 = vshrl.u32 %v123, 7
  %v125 = vsub.s32 0, %v124
  %v126 = vrot.slane %v117, %v125
  %v127 = vlaneseq
  %v128 = vshrl.u32 %v127, 7
  %v129 = vsub.s32 1, %v128
  %v130 = vrot.slane %v117, %v129
  %v133 = vmul.f32 %v120, %v126
  %v134 = vmul.f32 %v120, %v130
  %v135 = vadd.f32 %v93, %v133
  %v136 = vadd.f32 %v94, %v134
  %s137 = scalar_lea.vmem [#allocation2], 5
  %v138 = vld [vmem:[%s137] ss:$8 sm:$0x3]
  %139 = vset.pattern.permute.xlu0 5
  %140 = vperm.xlu0 %139, %v35
  %v141 = vpop.permute.xlu0 %140
  %v144 = vlaneseq
  %v145 = vshrl.u32 %v144, 7
  %v146 = vsub.s32 0, %v145
  %v147 = vrot.slane %v138, %v146
  %v148 = vlaneseq
  %v149 = vshrl.u32 %v148, 7
  %v150 = vsub.s32 1, %v149
  %v151 = vrot.slane %v138, %v150
  %v154 = vmul.f32 %v141, %v147
  %v155 = vmul.f32 %v141, %v151
  %v156 = vadd.f32 %v114, %v154
  %v157 = vadd.f32 %v115, %v155
  %s158 = scalar_lea.vmem [#allocation2], 6
  %v159 = vld [vmem:[%s158] ss:$8 sm:$0x3]
  %160 = vset.pattern.permute.xlu0 6
  %161 = vperm.xlu0 %160, %v35
  %v162 = vpop.permute.xlu0 %161
  %v165 = vlaneseq
  %v166 = vshrl.u32 %v165, 7
  %v167 = vsub.s32 0, %v166
  %v168 = vrot.slane %v159, %v167
  %v169 = vlaneseq
  %v170 = vshrl.u32 %v169, 7
  %v171 = vsub.s32 1, %v170
  %v172 = vrot.slane %v159, %v171
  %v175 = vmul.f32 %v162, %v168
  %v176 = vmul.f32 %v162, %v172
  %v177 = vadd.f32 %v135, %v175
  %v178 = vadd.f32 %v136, %v176
  %s179 = scalar_lea.vmem [#allocation2], 7
  %v180 = vld [vmem:[%s179] ss:$8 sm:$0x3]
  %181 = vset.pattern.permute.xlu0 7
  %182 = vperm.xlu0 %181, %v35
  %v183 = vpop.permute.xlu0 %182
  %v186 = vlaneseq
  %v187 = vshrl.u32 %v186, 7
  %v188 = vsub.s32 0, %v187
  %v189 = vrot.slane %v180, %v188
  %v190 = vlaneseq
  %v191 = vshrl.u32 %v190, 7
  %v192 = vsub.s32 1, %v191
  %v193 = vrot.slane %v180, %v192
  %v196 = vmul.f32 %v183, %v189
  %v197 = vmul.f32 %v183, %v193
  %v198 = vadd.f32 %v156, %v196
  %v199 = vadd.f32 %v157, %v197
  %v200 = vadd.f32 %v177, %v198
  %v201 = vadd.f32 %v178, %v199
  %202 = vset.pattern.permute.xlu0 1
  %203 = vperm.xlu0 %202, %v21
  %v204 = vpop.permute.xlu0 %203
  %v206 = vadd.f32 %v200, %v204
  %v207 = vadd.f32 %v201, %v204
  %v208 = vsub.f32 %v206, %v22
  %v209 = vsub.f32 %v207, %v23
  %v210 = vmul.f32 %v208, %v208
  %v211 = vmul.f32 %v209, %v209
  %v212 = vadd.f32 %v210, %v211
  %213 = vst [vmem:[%s4] sm:$0xff] %v212
  // Predicated region
  $region18: #{rectified_flow_forward.1} parent=0 // pred_check
    _
  $region19: #{rectified_flow_forward.1} parent=0 // pred_check_branch
    %215 = sbr.rel (0) target = $region21
  $region20: #{rectified_flow_forward.1} parent=0 // pred_region
    _
  $region21: #{rectified_flow_forward.1} parent=0 // pred_fallthru
    _
  // Predicated region
  $region22: #{rectified_flow_forward.1} parent=0 // pred_check
    _
  $region23: #{rectified_flow_forward.1} parent=0 // pred_check_branch
    %217 = sbr.rel (0) target = $region25
  $region24: #{rectified_flow_forward.1} parent=0 // pred_region
    _
  $region25: #{rectified_flow_forward.1} parent=0 // pred_fallthru
    _

</llo_original>
